<compile_context>
chip_gen: v6e
topology: v6e:2x2x1
jax: 0.10.0
libtpu: 0.0.40
codegen_flags: <defaults>
</compile_context>

<pallas_src>
import math

import jax
import jax.numpy as jnp
from jax import lax
from jax.experimental import pallas as pl
from jax.experimental.pallas import tpu as pltpu


def _gelu_exact(x):
    # PyTorch nn.GELU() default: exact erf-based GELU (computed in f32).
    return 0.5 * x * (1.0 + lax.erf(x * (1.0 / math.sqrt(2.0))))


def _round_up(x, m):
    return ((x + m - 1) // m) * m


# --------------------------------------------------------------------------
# Kernel body
# --------------------------------------------------------------------------
def mlp_kernel(x_ref, wgu_ref, bgu_ref, w3_ref, b3_ref, o_ref, acc_ref):
    """One (row-tile i, hidden-slab h) step of the fused Gemma MLP."""
    h = pl.program_id(1)
    th = wgu_ref.shape[1] // 2

    x = x_ref[...]                                              # (tm, Dp) bf16
    # Fused gate||up projection: one MXU pass of the x LHS per step.
    gu = jnp.dot(x, wgu_ref[...], preferred_element_type=jnp.float32)
    gu = gu + bgu_ref[...]                                      # (tm, 2*th) f32
    gate = gu[:, :th]
    up = gu[:, th:]
    hidden = _gelu_exact(gate) * up                             # (tm, th) f32

    # Down-projection contribution of this hidden slab.
    partial = jnp.dot(hidden.astype(w3_ref.dtype), w3_ref[...],
                      preferred_element_type=jnp.float32)       # (tm, Dp) f32

    @pl.when(h == 0)
    def _init():
        # Fold the down-projection bias into the accumulator init.
        acc_ref[...] = jnp.broadcast_to(b3_ref[...], acc_ref.shape)

    acc_ref[...] += partial

    @pl.when(h == pl.num_programs(1) - 1)
    def _finalize():
        o_ref[...] = acc_ref[...].astype(o_ref.dtype)


# --------------------------------------------------------------------------
# VMEM / tile sizing helpers
# --------------------------------------------------------------------------
def _vmem_capacity_bytes():
    try:
        return int(pltpu.get_tpu_info().vmem_capacity_bytes)
    except Exception:
        return 128 * 1024 * 1024


def _pick_vmem_limit_bytes(vmem_cap):
    # Leave headroom (v7x only has 64 MiB/TC); cap at ~100 MiB on v5e/v6e.
    return int(min(max(vmem_cap - 8 * 1024 * 1024, 32 * 1024 * 1024),
                   100 * 1024 * 1024))


def _working_set_bytes(tm, th, Dp, out_itemsize, cdt_itemsize=2):
    """Per-step VMEM footprint: double-buffered tiles + f32 accumulator."""
    x_t = tm * Dp * cdt_itemsize
    wgu_t = Dp * 2 * th * cdt_itemsize
    w3_t = th * Dp * cdt_itemsize
    b_t = (2 * th + Dp) * 4
    out_t = tm * Dp * out_itemsize
    acc = tm * Dp * 4
    return 2 * (x_t + wgu_t + w3_t + b_t + out_t) + acc


def _select_tiles(M, Dp, H, out_itemsize, vmem_cap):
    """Roofline- and VMEM-aware (tm, th) selection."""
    usable = int(_pick_vmem_limit_bytes(vmem_cap) * 0.9)
    two_cores_small_vmem = vmem_cap <= 96 * 1024 * 1024   # v7x: 64 MiB / TC

    # Row tile: arithmetic intensity w.r.t. re-streamed weight bytes == tm
    # FLOPs/byte, so tm should clear ~650 (v6e) / ~600 (v7x) to be MXU-bound.
    tm = min(1024, _round_up(M, 8))
    if two_cores_small_vmem and M >= 16:
        # Keep >= 2 row tiles so both v7x TensorCores get work.
        tm = min(tm, _round_up((M + 1) // 2, 8))

    Hp128 = _round_up(H, 128)
    th_candidates = [c for c in (2048, 1024, 512, 256, 128) if c <= Hp128]
    if not th_candidates:
        th_candidates = [Hp128]

    while True:
        for th in th_candidates:
            if _working_set_bytes(tm, th, Dp, out_itemsize) <= usable:
                return tm, th
        if tm <= 8:
            return tm, th_candidates[-1]
        # Shrink rows only as a last resort (hurts weight-streaming
        # amortization); prefer the smaller th already tried above.
        tm = max(8, _round_up(tm // 2, 8))


# --------------------------------------------------------------------------
# Weight packing (hoistable out of the hot loop)
# --------------------------------------------------------------------------
def pack_mlp_weights(wg, bg, wu, bu, w3, b3, *, th, Dp, Hp, compute_dtype):
    """Cast/pad weights in the compute dtype and interleave gate/up per slab."""
    D, H = wg.shape

    def pad2(a, r, c):
        if a.shape == (r, c):
            return a
        return jnp.pad(a, ((0, r - a.shape[0]), (0, c - a.shape[1])))

    wg_p = pad2(wg.astype(compute_dtype), Dp, Hp)
    wu_p = pad2(wu.astype(compute_dtype), Dp, Hp)
    w3_p = pad2(w3.astype(compute_dtype), Hp, Dp)
    bg_p = pad2(bg.reshape(1, H).astype(jnp.float32), 1, Hp)
    bu_p = pad2(bu.reshape(1, H).astype(jnp.float32), 1, Hp)
    b3_p = pad2(b3.reshape(1, D).astype(jnp.float32), 1, Dp)

    n_h = Hp // th
    # Interleave gate/up per hidden slab so a single (Dp, 2*th) BlockSpec
    # delivers [gate cols of slab h | up cols of slab h].
    wgu = jnp.concatenate(
        [wg_p.reshape(Dp, n_h, th), wu_p.reshape(Dp, n_h, th)], axis=2
    ).reshape(Dp, 2 * Hp)
    bgu = jnp.concatenate(
        [bg_p.reshape(1, n_h, th), bu_p.reshape(1, n_h, th)], axis=2
    ).reshape(1, 2 * Hp)
    return wgu, bgu, w3_p, b3_p


# --------------------------------------------------------------------------
# Host wrapper
# --------------------------------------------------------------------------
def gemma_mlp(x, wg, bg, wu, bu, w3, b3, *, tm=None, th=None,
              compute_dtype=jnp.bfloat16):
    """Fused Gemma MLP.

    x: [..., D].  wg/wu: [D, H] (pre-transposed), w3: [H, D],
    biases: [H]/[1,H] and [D]/[1,D].
    """
    orig_shape = x.shape
    D = orig_shape[-1]
    H = wg.shape[1]
    M = int(math.prod(orig_shape[:-1])) if len(orig_shape) > 1 else 1
    x2 = x.reshape(M, D)
    out_dtype = x.dtype
    out_itemsize = jnp.dtype(out_dtype).itemsize
    cdt_bytes = jnp.dtype(compute_dtype).itemsize

    # 256-aligned D for the 2x256x256 MXU on v6e/v7x; 128 suffices for D<=128.
    Dp = _round_up(D, 256) if D > 128 else _round_up(D, 128)

    vmem_cap = _vmem_capacity_bytes()
    vmem_limit = _pick_vmem_limit_bytes(vmem_cap)
    if tm is None or th is None:
        auto_tm, auto_th = _select_tiles(M, Dp, H, out_itemsize, vmem_cap)
        if tm is None:
            tm = auto_tm
        if th is None:
            th = auto_th
    tm = max(8, min(_round_up(int(tm), 8), _round_up(M, 8)))
    th = max(128, min(_round_up(int(th), 128), _round_up(H, 128)))

    Mp = _round_up(M, tm)
    Hp = _round_up(H, th)

    ws = _working_set_bytes(tm, th, Dp, out_itemsize, cdt_bytes)
    assert ws <= vmem_limit, (
        f"per-step VMEM working set {ws / 2**20:.1f} MiB exceeds the "
        f"{vmem_limit / 2**20:.1f} MiB limit; shrink tm/th")

    # Pad x directly in the compute dtype (no f32 round-trip); zero padding is
    # mathematically exact and sliced off afterwards.
    x_p = x2.astype(compute_dtype)
    if (Mp, Dp) != (M, D):
        x_p = jnp.pad(x_p, ((0, Mp - M), (0, Dp - D)))

    # TODO(synk): in a full model, hoist pack_mlp_weights out of the per-token
    # forward path (weights are static across calls).
    wgu, bgu, w3_p, b3_p = pack_mlp_weights(
        wg, bg, wu, bu, w3, b3, th=th, Dp=Dp, Hp=Hp, compute_dtype=compute_dtype)

    grid = (Mp // tm, Hp // th)
    n_row_tiles = grid[0]

    # Weight slabs are re-streamed once per row tile; x is read once per row
    # tile (its block index does not change along h); output written once.
    cost = pl.CostEstimate(
        flops=6 * Mp * Dp * Hp,                # 3 matmuls x 2*M*D*H
        transcendentals=Mp * Hp,               # erf per hidden element
        bytes_accessed=(
            Mp * Dp * cdt_bytes
            + n_row_tiles * (3 * Dp * Hp * cdt_bytes + (2 * Hp + Dp) * 4)
            + Mp * Dp * out_itemsize),
    )

    y_p = pl.pallas_call(
        mlp_kernel,
        out_shape=jax.ShapeDtypeStruct((Mp, Dp), out_dtype),
        grid_spec=pltpu.PrefetchScalarGridSpec(
            num_scalar_prefetch=0,
            grid=grid,
            in_specs=[
                pl.BlockSpec((tm, Dp), lambda i, h: (i, 0)),       # x row tile
                pl.BlockSpec((Dp, 2 * th), lambda i, h: (0, h)),   # Wg||Wu slab
                pl.BlockSpec((1, 2 * th), lambda i, h: (0, h)),    # bg||bu slab
                pl.BlockSpec((th, Dp), lambda i, h: (h, 0)),       # W3 slab
                pl.BlockSpec((1, Dp), lambda i, h: (0, 0)),        # b3 (const)
            ],
            out_specs=pl.BlockSpec((tm, Dp), lambda i, h: (i, 0)),
            scratch_shapes=[pltpu.VMEM((tm, Dp), jnp.float32)],
        ),
        compiler_params=pltpu.CompilerParams(
            dimension_semantics=("parallel", "arbitrary"),
            vmem_limit_bytes=vmem_limit,
        ),
        cost_estimate=cost,
    )(x_p, wgu, bgu, w3_p, b3_p)

    return y_p[:M, :D].reshape(orig_shape[:-1] + (D,))


# --------------------------------------------------------------------------
# Self-test
# --------------------------------------------------------------------------
if __name__ == "__main__":
    # Small shapes consistent with the module (lane-friendly dims).
    batch, seq, dim_size, hidden_size = 2, 64, 128, 512

    key = jax.random.PRNGKey(0)
    kx, kg, kbg, ku, kbu, k3, kb3 = jax.random.split(key, 7)

    x = jax.random.normal(kx, (batch, seq, dim_size), dtype=jnp.float32)

    # Deterministic Linear-style init (weights stored pre-transposed).
    scale_in = 1.0 / math.sqrt(dim_size)
    scale_hid = 1.0 / math.sqrt(hidden_size)
    wg = jax.random.uniform(kg, (dim_size, hidden_size), jnp.float32,
                            -scale_in, scale_in)
    bg = jax.random.uniform(kbg, (hidden_size,), jnp.float32,
                            -scale_in, scale_in)
    wu = jax.random.uniform(ku, (dim_size, hidden_size), jnp.float32,
                            -scale_in, scale_in)
    bu = jax.random.uniform(kbu, (hidden_size,), jnp.float32,
                            -scale_in, scale_in)
    w3 = jax.random.uniform(k3, (hidden_size, dim_size), jnp.float32,
                            -scale_hid, scale_hid)
    b3 = jax.random.uniform(kb3, (dim_size,), jnp.float32,
                            -scale_hid, scale_hid)

    # Small tiles here purely to exercise the 2-D grid + accumulator path at
    # toy shapes; production calls omit tm/th and get per-chip auto-selection.
    y = gemma_mlp(x, wg, bg, wu, bu, w3, b3, tm=64, th=128)
    y = jax.block_until_ready(y)

    # Reference with the same bf16 quantization of x / weights (the kernel
    # runs bf16 matmuls with f32 accumulation); biases & GELU stay f32.
    q = lambda a: a.astype(jnp.bfloat16).astype(jnp.float32)
    x2d = x.reshape(-1, dim_size)
    gate_ref = q(x2d) @ q(wg) + bg[None, :]
    up_ref = q(x2d) @ q(wu) + bu[None, :]
    y_ref = (_gelu_exact(gate_ref) * up_ref) @ q(w3) + b3[None, :]
    y_ref = y_ref.reshape(batch, seq, dim_size)

    max_err = float(jnp.max(jnp.abs(y - y_ref)))
    assert jnp.allclose(y, y_ref, atol=5e-2, rtol=5e-2), (
        "mismatch vs reference: max abs err = %g" % max_err)

    print("KERNEL_OK")
</pallas_src>

<mosaic_0001>
module attributes {stable_mosaic.version = 11 : i64} {
  func.func @mlp_kernel(%arg0: i32, %arg1: i32, %arg2: memref<64x128xbf16, #tpu.memory_space<vmem>>, %arg3: memref<128x256xbf16, #tpu.memory_space<vmem>>, %arg4: memref<1x256xf32, #tpu.memory_space<vmem>>, %arg5: memref<128x128xbf16, #tpu.memory_space<vmem>>, %arg6: memref<1x128xf32, #tpu.memory_space<vmem>>, %arg7: memref<64x128xf32, #tpu.memory_space<vmem>>, %arg8: memref<64x128xf32, #tpu.memory_space<vmem>>) attributes {dimension_semantics = [#tpu.dimension_semantics<parallel>, #tpu.dimension_semantics<arbitrary>], iteration_bounds = array<i64: 2, 4>, scalar_prefetch = 0 : i64, scratch_operands = 1 : i64, tpu.core_type = #tpu.core_type<tc>, window_params = [{transform_indices = @transform_0, window_bounds = array<i64: 64, 128>}, {transform_indices = @transform_1, window_bounds = array<i64: 128, 256>}, {transform_indices = @transform_2, window_bounds = array<i64: 1, 256>}, {transform_indices = @transform_3, window_bounds = array<i64: 128, 128>}, {pipeline_mode = #tpu.pipeline_mode<synchronous>, transform_indices = @transform_4, window_bounds = array<i64: 1, 128>}, {transform_indices = @transform_5, window_bounds = array<i64: 64, 128>}]} {
    %c0 = arith.constant 0 : index
    %c0_0 = arith.constant 0 : index
    %0 = vector.load %arg2[%c0, %c0_0] : memref<64x128xbf16, #tpu.memory_space<vmem>>, vector<64x128xbf16>
    %c0_1 = arith.constant 0 : index
    %c0_2 = arith.constant 0 : index
    %1 = vector.load %arg3[%c0_1, %c0_2] : memref<128x256xbf16, #tpu.memory_space<vmem>>, vector<128x256xbf16>
    %cst = arith.constant dense<0.000000e+00> : vector<64x256xf32>
    %2 = tpu.matmul %0, %1, %cst {dimension_numbers = #tpu.dot_dimension_numbers<[1], [0], [0], [1], [0, 0, 1, 1], [], []>} : vector<64x128xbf16>, vector<128x256xbf16>, vector<64x256xf32> -> vector<64x256xf32>
    %c0_3 = arith.constant 0 : index
    %c0_4 = arith.constant 0 : index
    %3 = vector.load %arg4[%c0_3, %c0_4] : memref<1x256xf32, #tpu.memory_space<vmem>>, vector<1x256xf32>
    %4 = vector.broadcast %3 : vector<1x256xf32> to vector<64x256xf32>
    %5 = arith.addf %2, %4 : vector<64x256xf32>
    %6 = vector.extract_strided_slice %5 {offsets = [0, 0], sizes = [64, 128], strides = [1, 1]} : vector<64x256xf32> to vector<64x128xf32>
    %7 = vector.extract_strided_slice %5 {offsets = [0, 128], sizes = [64, 128], strides = [1, 1]} : vector<64x256xf32> to vector<64x128xf32>
    %cst_5 = arith.constant 5.000000e-01 : f32
    %8 = vector.broadcast %cst_5 : f32 to vector<64x128xf32>
    %9 = arith.mulf %8, %6 : vector<64x128xf32>
    %cst_6 = arith.constant 0.707106769 : f32
    %10 = vector.broadcast %cst_6 : f32 to vector<64x128xf32>
    %11 = arith.mulf %6, %10 : vector<64x128xf32>
    %12 = math.erf %11 : vector<64x128xf32>
    %cst_7 = arith.constant 1.000000e+00 : f32
    %13 = vector.broadcast %cst_7 : f32 to vector<64x128xf32>
    %14 = arith.addf %13, %12 : vector<64x128xf32>
    %15 = arith.mulf %9, %14 : vector<64x128xf32>
    %16 = arith.mulf %15, %7 : vector<64x128xf32>
    %17 = arith.truncf %16 : vector<64x128xf32> to vector<64x128xbf16>
    %c0_8 = arith.constant 0 : index
    %c0_9 = arith.constant 0 : index
    %18 = vector.load %arg5[%c0_8, %c0_9] : memref<128x128xbf16, #tpu.memory_space<vmem>>, vector<128x128xbf16>
    %cst_10 = arith.constant dense<0.000000e+00> : vector<64x128xf32>
    %19 = tpu.matmul %17, %18, %cst_10 {dimension_numbers = #tpu.dot_dimension_numbers<[1], [0], [0], [1], [0, 0, 1, 1], [], []>} : vector<64x128xbf16>, vector<128x128xbf16>, vector<64x128xf32> -> vector<64x128xf32>
    %c0_i32 = arith.constant 0 : i32
    %20 = arith.cmpi eq, %arg1, %c0_i32 : i32
    %21 = arith.extui %20 : i1 to i32
    %c0_i32_11 = arith.constant 0 : i32
    %22 = arith.cmpi ne, %21, %c0_i32_11 : i32
    scf.if %22 {
      %c0_17 = arith.constant 0 : index
      %c0_18 = arith.constant 0 : index
      %29 = vector.load %arg6[%c0_17, %c0_18] : memref<1x128xf32, #tpu.memory_space<vmem>>, vector<1x128xf32>
      %30 = vector.shape_cast %29 : vector<1x128xf32> to vector<1x128xf32>
      %31 = vector.broadcast %30 : vector<1x128xf32> to vector<64x128xf32>
      %c0_19 = arith.constant 0 : index
      %c0_20 = arith.constant 0 : index
      %32 = vector.load %arg8[%c0_19, %c0_20] : memref<64x128xf32, #tpu.memory_space<vmem>>, vector<64x128xf32>
      tpu.vector_store %arg8[%c0_19, %c0_20], %31 {strides = array<i32>} : memref<64x128xf32, #tpu.memory_space<vmem>>, vector<64x128xf32>,
    } else {
    }
    %c0_12 = arith.constant 0 : index
    %c0_13 = arith.constant 0 : index
    %23 = vector.load %arg8[%c0_12, %c0_13] : memref<64x128xf32, #tpu.memory_space<vmem>>, vector<64x128xf32>
    %24 = arith.addf %23, %19 : vector<64x128xf32>
    %c0_14 = arith.constant 0 : index
    %c0_15 = arith.constant 0 : index
    %25 = vector.load %arg8[%c0_14, %c0_15] : memref<64x128xf32, #tpu.memory_space<vmem>>, vector<64x128xf32>
    tpu.vector_store %arg8[%c0_14, %c0_15], %24 {strides = array<i32>} : memref<64x128xf32, #tpu.memory_space<vmem>>, vector<64x128xf32>,
    %c3_i32 = arith.constant 3 : i32
    %26 = arith.cmpi eq, %arg1, %c3_i32 : i32
    %27 = arith.extui %26 : i1 to i32
    %c0_i32_16 = arith.constant 0 : i32
    %28 = arith.cmpi ne, %27, %c0_i32_16 : i32
    scf.if %28 {
      %c0_17 = arith.constant 0 : index
      %c0_18 = arith.constant 0 : index
      %29 = vector.load %arg8[%c0_17, %c0_18] : memref<64x128xf32, #tpu.memory_space<vmem>>, vector<64x128xf32>
      %c0_19 = arith.constant 0 : index
      %c0_20 = arith.constant 0 : index
      %30 = vector.load %arg7[%c0_19, %c0_20] : memref<64x128xf32, #tpu.memory_space<vmem>>, vector<64x128xf32>
      tpu.vector_store %arg7[%c0_19, %c0_20], %29 {strides = array<i32>} : memref<64x128xf32, #tpu.memory_space<vmem>>, vector<64x128xf32>,
    } else {
    }
    return
  }
  func.func @transform_0(%arg0: i32, %arg1: i32) -> (i32, i32) {
    %c0_i32 = arith.constant 0 : i32
    %c0_i32_0 = arith.constant 0 : i32
    return %arg0, %c0_i32 : i32, i32
  }
  func.func @transform_1(%arg0: i32, %arg1: i32) -> (i32, i32) {
    %c0_i32 = arith.constant 0 : i32
    %c0_i32_0 = arith.constant 0 : i32
    return %c0_i32, %arg1 : i32, i32
  }
  func.func @transform_2(%arg0: i32, %arg1: i32) -> (i32, i32) {
    %c0_i32 = arith.constant 0 : i32
    %c0_i32_0 = arith.constant 0 : i32
    return %c0_i32, %arg1 : i32, i32
  }
  func.func @transform_3(%arg0: i32, %arg1: i32) -> (i32, i32) {
    %c0_i32 = arith.constant 0 : i32
    %c0_i32_0 = arith.constant 0 : i32
    return %arg1, %c0_i32 : i32, i32
  }
  func.func @transform_4(%arg0: i32, %arg1: i32) -> (i32, i32) {
    %c0_i32 = arith.constant 0 : i32
    %c0_i32_0 = arith.constant 0 : i32
    %c0_i32_1 = arith.constant 0 : i32
    return %c0_i32, %c0_i32_0 : i32, i32
  }
  func.func @transform_5(%arg0: i32, %arg1: i32) -> (i32, i32) {
    %c0_i32 = arith.constant 0 : i32
    %c0_i32_0 = arith.constant 0 : i32
    return %arg0, %c0_i32 : i32, i32
  }
}

</mosaic_0001>

<llo_original>
// kernel: tpu_custom_call.1
$region0: #{tpu_custom_call.1}
  #allocation0 [shape = 'u32[]', space=smem, size = 0x4, offset = 0x4, fixed_abs, tag = 'smem constant byte address 0x4 - core index']
  #allocation1 [shape = 'u32[144,128]{1,0:T(1,128)}', space=vmem, size = 0x12000, scoped, tag = 'internal scratch']
  #allocation2 [shape = 'f32[64,128]{1,0:T(8,128)}', space=vmem, size = 0x8000, scoped, tag = 'scratch operand']
  %s0 = inlined_call_operand.hbm [shape: bf16[128,128], index: 0, kind: input, shape index: {}]
  %s1 = inlined_call_operand.hbm [shape: bf16[128,1024], index: 1, kind: input, shape index: {}]
  %s2 = inlined_call_operand.hbm [shape: f32[1,1024], index: 2, kind: input, shape index: {}]
  %s3 = inlined_call_operand.hbm [shape: bf16[512,128], index: 3, kind: input, shape index: {}]
  %s4 = inlined_call_operand.vmem [shape: f32[1,128], index: 4, kind: input, shape index: {}]
  %s5 = inlined_call_operand.hbm [shape: f32[128,128], index: 5, kind: output, shape index: {}]
  %s6 = sld [smem:[#allocation0]]
  $region77: #{tpu_custom_call.1} parent=0
    _
  %s8 = ssub.s32 1, %s6
  %s9 = scalar_select 0, %s8, %s6
  $region1: #{tpu_custom_call.1} parent=0
    #allocation3 [shape = 'u8[32768]{0}', space=vmem, size = 0x8000, scoped, tag = 'input window, operand 0']
    #allocation4 [shape = 's32[2]{0}', space=sflag, size = 0x8, scoped, tag = 'scoped memory for tpu_custom_call.1']
    #allocation5 [shape = 's32[2]{0}', space=sflag, size = 0x8, scoped, tag = 'scoped memory for tpu_custom_call.1']
    #allocation6 [shape = 'u8[131072]{0}', space=vmem, size = 0x20000, scoped, tag = 'input window, operand 1']
    #allocation7 [shape = 's32[2]{0}', space=sflag, size = 0x8, scoped, tag = 'scoped memory for tpu_custom_call.1']
    #allocation8 [shape = 'u8[2048]{0}', space=vmem, size = 0x800, scoped, tag = 'input window, operand 2']
    #allocation9 [shape = 'u8[65536]{0}', space=vmem, size = 0x10000, scoped, tag = 'input window, operand 3']
    #allocation10 [shape = 's32[2]{0}', space=sflag, size = 0x8, scoped, tag = 'scoped memory for tpu_custom_call.1']
    #allocation11 [shape = 'u8[65536]{0}', space=vmem, size = 0x10000, scoped, tag = 'output window, operand 0']
    %10 = vsyncpa [#allocation4], 0
    %s11 = scalar_lea.sflag [#allocation4], 1
    %12 = vsyncpa %s11, 0
    %13 = vsyncpa [#allocation7], 0
    %s14 = scalar_lea.sflag [#allocation7], 1
    %15 = vsyncpa %s14, 0
    %16 = vsyncpa [#allocation10], 0
    %s17 = scalar_lea.sflag [#allocation10], 1
    %18 = vsyncpa %s17, 0
    %19 = vsyncpa [#allocation5], 0
    %s20 = scalar_lea.sflag [#allocation5], 1
    %21 = vsyncpa %s20, 0
    loop: start=0, step=1, limit=10
    $region2: #{tpu_custom_call.1} parent=1 // loop_pre_header
      _
    $region3: #{tpu_custom_call.1} parent=1 // loop_header
      %s23 = sphi 0, %s27
      %p24 = scmp.ge.s32.totalorder %s23, 10
      %s30 = sphi 0, %s42
      %s31 = sphi 0, %s38
      %s32 = sphi 0, %s30
      %s33 = sphi 0, %s31
      %s34 = sphi 0, %s32
      %s35 = sphi 0, %s33
      %s45 = sphi 0, %s47
      %s48 = sphi 0, %s45
      %s49 = sphi 0, %s48
      %s65 = sphi 0, %s49
      %s71 = sphi 0, %s73
      %s74 = sphi 0, %s71
      %s75 = sphi 0, %s74
      %s91 = sphi 0, %s75
      %s97 = sphi 0, %s99
      %s100 = sphi 0, %s97
      %s101 = sphi 0, %s100
      %s117 = sphi 0, %s101
      %s123 = sphi 0, %s125
      %s126 = sphi 0, %s123
      %s127 = sphi 0, %s126
      %s143 = sphi 0, %s127
      %s147 = sphi 0, %s147
      %s149 = sphi 0, %s147
      %s150 = sphi 0, %s149
      %s164 = sphi 0, %s150
      %s170 = sphi 0, %s172
      %s173 = sphi 0, %s170
      %s174 = sphi 0, %s173
      %s190 = sphi 0, %s174
    $region4: #{tpu_custom_call.1} parent=1 // loop_header_branch
      %26 = sbr.rel (%p24) target = $region8
    $region5: #{tpu_custom_call.1} parent=1 // loop_body
      %s28 = ssub.s32 %s23, 1
      %s29 = ssub.s32 %s23, 2
      %s36 = sadd.s32 1, %s31
      %p37 = scmp.ge.s32.totalorder %s36, 4
      %s38 = scalar_select %p37, 0, %s36
      %s39 = sadd.s32 1, %s30
      %s40 = scalar_select %p37, %s39, %s30
      %p41 = scmp.ge.s32.totalorder %s40, 2
      %s42 = scalar_select %p41, 0, %s40
      %s43 = ssub.s32 %s30, %s42
      %p44 = scmp.eq.s32.totalorder %s43, 0
      %s46 = sadd.s32 %s45, 1
      %s47 = scalar_select %p44, %s45, %s46
      %p50 = pneg %p44
      %p51 = scmp.eq.s32.totalorder %s23, 7
      %p52 = por %p50, %p51
      %p53 = scmp.ne.s32.totalorder %s45, %s48
      %p54 = scmp.eq.s32.totalorder %s23, 0
      %p55 = por %p53, %p54
      %p56 = scmp.ne.s32.totalorder %s45, %s48
      %p57 = scmp.eq.s32.totalorder %s28, 7
      %p58 = por %p56, %p57
      %p59 = scmp.ne.s32.totalorder %s48, %s49
      %p60 = scmp.eq.s32.totalorder %s28, 0
      %p61 = por %p59, %p60
      %p62 = scmp.ne.s32.totalorder %s48, %s49
      %p63 = scmp.eq.s32.totalorder %s29, 7
      %p64 = por %p62, %p63
      %p66 = scmp.ne.s32.totalorder %s49, %s65
      %p67 = scmp.eq.s32.totalorder %s29, 0
      %p68 = por %p66, %p67
      %s69 = ssub.s32 %s31, %s38
      %p70 = scmp.eq.s32.totalorder %s69, 0
      %s72 = sadd.s32 %s71, 1
      %s73 = scalar_select %p70, %s71, %s72
      %p76 = pneg %p70
      %p77 = scmp.eq.s32.totalorder %s23, 7
      %p78 = por %p76, %p77
      %p79 = scmp.ne.s32.totalorder %s71, %s74
      %p80 = scmp.eq.s32.totalorder %s23, 0
      %p81 = por %p79, %p80
      %p82 = scmp.ne.s32.totalorder %s71, %s74
      %p83 = scmp.eq.s32.totalorder %s28, 7
      %p84 = por %p82, %p83
      %p85 = scmp.ne.s32.totalorder %s74, %s75
      %p86 = scmp.eq.s32.totalorder %s28, 0
      %p87 = por %p85, %p86
      %p88 = scmp.ne.s32.totalorder %s74, %s75
      %p89 = scmp.eq.s32.totalorder %s29, 7
      %p90 = por %p88, %p89
      %p92 = scmp.ne.s32.totalorder %s75, %s91
      %p93 = scmp.eq.s32.totalorder %s29, 0
      %p94 = por %p92, %p93
      %s95 = ssub.s32 %s31, %s38
      %p96 = scmp.eq.s32.totalorder %s95, 0
      %s98 = sadd.s32 %s97, 1
      %s99 = scalar_select %p96, %s97, %s98
      %p102 = pneg %p96
      %p103 = scmp.eq.s32.totalorder %s23, 7
      %p104 = por %p102, %p103
      %p105 = scmp.ne.s32.totalorder %s97, %s100
      %p106 = scmp.eq.s32.totalorder %s23, 0
      %p107 = por %p105, %p106
      %p108 = scmp.ne.s32.totalorder %s97, %s100
      %p109 = scmp.eq.s32.totalorder %s28, 7
      %p110 = por %p108, %p109
      %p111 = scmp.ne.s32.totalorder %s100, %s101
      %p112 = scmp.eq.s32.totalorder %s28, 0
      %p113 = por %p111, %p112
      %p114 = scmp.ne.s32.totalorder %s100, %s101
      %p115 = scmp.eq.s32.totalorder %s29, 7
      %p116 = por %p114, %p115
      %p118 = scmp.ne.s32.totalorder %s101, %s117
      %p119 = scmp.eq.s32.totalorder %s29, 0
      %p120 = por %p118, %p119
      %s121 = ssub.s32 %s31, %s38
      %p122 = scmp.eq.s32.totalorder %s121, 0
      %s124 = sadd.s32 %s123, 1
      %s125 = scalar_select %p122, %s123, %s124
      %p128 = pneg %p122
      %p129 = scmp.eq.s32.totalorder %s23, 7
      %p130 = por %p128, %p129
      %p131 = scmp.ne.s32.totalorder %s123, %s126
      %p132 = scmp.eq.s32.totalorder %s23, 0
      %p133 = por %p131, %p132
      %p134 = scmp.ne.s32.totalorder %s123, %s126
      %p135 = scmp.eq.s32.totalorder %s28, 7
      %p136 = por %p134, %p135
      %p137 = scmp.ne.s32.totalorder %s126, %s127
      %p138 = scmp.eq.s32.totalorder %s28, 0
      %p139 = por %p137, %p138
      %p140 = scmp.ne.s32.totalorder %s126, %s127
      %p141 = scmp.eq.s32.totalorder %s29, 7
      %p142 = por %p140, %p141
      %p144 = scmp.ne.s32.totalorder %s127, %s143
      %p145 = scmp.eq.s32.totalorder %s29, 0
      %p146 = por %p144, %p145
      %s148 = sadd.s32 %s147, 1
      %p151 = scmp.eq.s32.totalorder %s23, 7
      %p152 = scmp.ne.s32.totalorder %s147, %s149
      %p153 = scmp.eq.s32.totalorder %s23, 0
      %p154 = por %p152, %p153
      %p155 = scmp.ne.s32.totalorder %s147, %s149
      %p156 = scmp.eq.s32.totalorder %s28, 7
      %p157 = por %p155, %p156
      %p158 = scmp.ne.s32.totalorder %s149, %s150
      %p159 = scmp.eq.s32.totalorder %s28, 0
      %p160 = por %p158, %p159
      %p161 = scmp.ne.s32.totalorder %s149, %s150
      %p162 = scmp.eq.s32.totalorder %s29, 7
      %p163 = por %p161, %p162
      %p165 = scmp.ne.s32.totalorder %s150, %s164
      %p166 = scmp.eq.s32.totalorder %s29, 0
      %p167 = por %p165, %p166
      %s168 = ssub.s32 %s30, %s42
      %p169 = scmp.eq.s32.totalorder %s168, 0
      %s171 = sadd.s32 %s170, 1
      %s172 = scalar_select %p169, %s170, %s171
      %p175 = pneg %p169
      %p176 = scmp.eq.s32.totalorder %s23, 7
      %p177 = por %p175, %p176
      %p178 = scmp.ne.s32.totalorder %s170, %s173
      %p179 = scmp.eq.s32.totalorder %s23, 0
      %p180 = por %p178, %p179
      %p181 = scmp.ne.s32.totalorder %s170, %s173
      %p182 = scmp.eq.s32.totalorder %s28, 7
      %p183 = por %p181, %p182
      %p184 = scmp.ne.s32.totalorder %s173, %s174
      %p185 = scmp.eq.s32.totalorder %s28, 0
      %p186 = por %p184, %p185
      %p187 = scmp.ne.s32.totalorder %s173, %s174
      %p188 = scmp.eq.s32.totalorder %s29, 7
      %p189 = por %p187, %p188
      %p191 = scmp.ne.s32.totalorder %s174, %s190
      %p192 = scmp.eq.s32.totalorder %s29, 0
      %p193 = por %p191, %p192
      %p194 = scmp.le.s32.totalorder 1, %s23
      %p195 = scmp.lt.s32.totalorder %s23, 9
      %p196 = pnand %p194, %p195
      %p197 = pneg %p196
      // Predicated region
      $region9: #{tpu_custom_call.1} parent=5 // pred_check
        _
      $region10: #{tpu_custom_call.1} parent=5 // pred_check_branch
        %199 = sbr.rel (%p196) target = $region12
      $region11: #{tpu_custom_call.1} parent=5 // pred_region
        %s200 = ssub.s32 %s23, 1
        // Predicated region
        $region13: #{tpu_custom_call.1} parent=11 // pred_check
          %p201 = pneg %p160
        $region14: #{tpu_custom_call.1} parent=11 // pred_check_branch
          %203 = sbr.rel (%p201) target = $region16
        $region15: #{tpu_custom_call.1} parent=11 // pred_region
          _
        $region16: #{tpu_custom_call.1} parent=11 // pred_fallthru
          _
      $region12: #{tpu_custom_call.1} parent=5 // pred_fallthru
        _
      %p204 = scmp.lt.s32.totalorder %s23, 8
      // Predicated region
      $region17: #{tpu_custom_call.1} parent=5 // pred_check
        %p205 = pneg %p204
      $region18: #{tpu_custom_call.1} parent=5 // pred_check_branch
        %207 = sbr.rel (%p205) target = $region20
      $region19: #{tpu_custom_call.1} parent=5 // pred_region
        // Predicated region
        $region21: #{tpu_custom_call.1} parent=19 // pred_check
          %p208 = pneg %p55
        $region22: #{tpu_custom_call.1} parent=19 // pred_check_branch
          %210 = sbr.rel (%p208) target = $region24
        $region23: #{tpu_custom_call.1} parent=19 // pred_region
          %s211 = sand.u32 %s45, 1
          %s212 = scalar_lea.sflag [#allocation4], %s211
          %s213 = sand.u32 %s45, 1
          %s214 = smul.addr %s213, 32
          %s215 = scalar_lea.vmem [#allocation3], %s214
          %s216 = smul.u32 8, %s30
          %s218 = ssub.s32 512, 512
          %219 = vsyncadd %s212, %s218
          %s220 = smul.addr %s216, 64
          %s221 = scalar_lea.hbm %s0, %s220
          %s222 = sshll.u32 %s215, 4
          %s223 = int_to_ptr.vmem [resolvable:$true] %s222
          %228 = dma.hbm_to_vmem [thread:$0]  %s221, 512, %s223, %s212, 64, 64, 4
        $region24: #{tpu_custom_call.1} parent=19 // pred_fallthru
          _
        // Predicated region
        $region25: #{tpu_custom_call.1} parent=19 // pred_check
          %p229 = pneg %p81
        $region26: #{tpu_custom_call.1} parent=19 // pred_check_branch
          %231 = sbr.rel (%p229) target = $region28
        $region27: #{tpu_custom_call.1} parent=19 // pred_region
          %s232 = sand.u32 %s23, 1
          %s233 = scalar_lea.sflag [#allocation7], %s232
          %s234 = sand.u32 %s71, 1
          %s235 = smul.addr %s234, 128
          %s236 = scalar_lea.vmem [#allocation6], %s235
          %s237 = smul.u32 2, %s31
          %s239 = ssub.s32 2048, 2048
          %240 = vsyncadd %s233, %s239
          %s241 = smul.addr %s237, 64
          %s242 = scalar_lea.hbm %s1, %s241
          %s243 = sshll.u32 %s236, 4
          %s244 = int_to_ptr.vmem [resolvable:$true] %s243
          %249 = dma.hbm_to_vmem [thread:$0]  %s242, 2048, %s244, %s233, 512, 128, 8
        $region28: #{tpu_custom_call.1} parent=19 // pred_fallthru
          _
        // Predicated region
        $region29: #{tpu_custom_call.1} parent=19 // pred_check
          %p250 = pneg %p107
        $region30: #{tpu_custom_call.1} parent=19 // pred_check_branch
          %252 = sbr.rel (%p250) target = $region32
        $region31: #{tpu_custom_call.1} parent=19 // pred_region
          %s253 = sand.u32 %s23, 1
          %s254 = scalar_lea.sflag [#allocation7], %s253
          %s255 = sand.u32 %s97, 1
          %s256 = smul.addr %s255, 2
          %s257 = scalar_lea.vmem [#allocation8], %s256
          %s258 = smul.u32 2, %s31
          %s260 = ssub.s32 32, 32
          %261 = vsyncadd %s254, %s260
          %s262 = smul.addr %s258, 16
          %s263 = scalar_lea.hbm %s2, %s262
          %s265 = sshll.u32 %s257, 4
          %s266 = int_to_ptr.vmem [resolvable:$true] %s265
          %268 = dma.hbm_to_vmem [thread:$0]  %s263, 32, %s266, %s254
        $region32: #{tpu_custom_call.1} parent=19 // pred_fallthru
          _
        // Predicated region
        $region33: #{tpu_custom_call.1} parent=19 // pred_check
          %p269 = pneg %p133
        $region34: #{tpu_custom_call.1} parent=19 // pred_check_branch
          %271 = sbr.rel (%p269) target = $region36
        $region35: #{tpu_custom_call.1} parent=19 // pred_region
          %s272 = sand.u32 %s123, 1
          %s273 = scalar_lea.sflag [#allocation10], %s272
          %s274 = sand.u32 %s123, 1
          %s275 = smul.addr %s274, 64
          %s276 = scalar_lea.vmem [#allocation9], %s275
          %s277 = smul.u32 16, %s31
          %s279 = ssub.s32 1024, 1024
          %280 = vsyncadd %s273, %s279
          %s281 = smul.addr %s277, 64
          %s282 = scalar_lea.hbm %s3, %s281
          %s283 = sshll.u32 %s276, 4
          %s284 = int_to_ptr.vmem [resolvable:$true] %s283
          %289 = dma.hbm_to_vmem [thread:$0]  %s282, 1024, %s284, %s273, 64, 64, 4
        $region36: #{tpu_custom_call.1} parent=19 // pred_fallthru
          _
      $region20: #{tpu_custom_call.1} parent=5 // pred_fallthru
        _
      %p290 = scmp.le.s32.totalorder 1, %s23
      %p291 = scmp.lt.s32.totalorder %s23, 9
      %p292 = pnand %p290, %p291
      %p293 = pneg %p292
      // Predicated region
      $region37: #{tpu_custom_call.1} parent=5 // pred_check
        _
      $region38: #{tpu_custom_call.1} parent=5 // pred_check_branch
        %295 = sbr.rel (%p292) target = $region40
      $region39: #{tpu_custom_call.1} parent=5 // pred_region
        %s296 = ssub.s32 %s23, 1
        %s297 = sand.u32 %s48, 1
        %s298 = scalar_lea.sflag [#allocation4], %s297
        %s299 = sand.u32 %s48, 1
        %s300 = smul.addr %s299, 32
        %s301 = scalar_lea.vmem [#allocation3], %s300
        // Predicated region
        $region41: #{tpu_custom_call.1} parent=39 // pred_check
          %p302 = pneg %p61
        $region42: #{tpu_custom_call.1} parent=39 // pred_check_branch
          %304 = sbr.rel (%p302) target = $region44
        $region43: #{tpu_custom_call.1} parent=39 // pred_region
          %305 = dma.done %s298, 512
        $region44: #{tpu_custom_call.1} parent=39 // pred_fallthru
          _
        %s306 = sand.u32 %s28, 1
        %s307 = scalar_lea.sflag [#allocation7], %s306
        %s308 = sand.u32 %s74, 1
        %s309 = smul.addr %s308, 128
        %s310 = scalar_lea.vmem [#allocation6], %s309
        // Predicated region
        $region45: #{tpu_custom_call.1} parent=39 // pred_check
          %p311 = pneg %p87
        $region46: #{tpu_custom_call.1} parent=39 // pred_check_branch
          %313 = sbr.rel (%p311) target = $region48
        $region47: #{tpu_custom_call.1} parent=39 // pred_region
          %314 = dma.done %s307, 2048
        $region48: #{tpu_custom_call.1} parent=39 // pred_fallthru
          _
        %s315 = sand.u32 %s28, 1
        %s316 = scalar_lea.sflag [#allocation7], %s315
        %s317 = sand.u32 %s100, 1
        %s318 = smul.addr %s317, 2
        %s319 = scalar_lea.vmem [#allocation8], %s318
        // Predicated region
        $region49: #{tpu_custom_call.1} parent=39 // pred_check
          %p320 = pneg %p113
        $region50: #{tpu_custom_call.1} parent=39 // pred_check_branch
          %322 = sbr.rel (%p320) target = $region52
        $region51: #{tpu_custom_call.1} parent=39 // pred_region
          %323 = dma.done %s316, 32
        $region52: #{tpu_custom_call.1} parent=39 // pred_fallthru
          _
        %s324 = sand.u32 %s126, 1
        %s325 = scalar_lea.sflag [#allocation10], %s324
        %s326 = sand.u32 %s126, 1
        %s327 = smul.addr %s326, 64
        %s328 = scalar_lea.vmem [#allocation9], %s327
        // Predicated region
        $region53: #{tpu_custom_call.1} parent=39 // pred_check
          %p329 = pneg %p139
        $region54: #{tpu_custom_call.1} parent=39 // pred_check_branch
          %331 = sbr.rel (%p329) target = $region56
        $region55: #{tpu_custom_call.1} parent=39 // pred_region
          %332 = dma.done %s325, 1024
        $region56: #{tpu_custom_call.1} parent=39 // pred_fallthru
          _
        %s333 = sand.u32 %s48, 1
        %s334 = scalar_lea.sflag [#allocation4], %s333
        %s335 = sand.u32 %s48, 1
        %s336 = smul.addr %s335, 32
        %s337 = scalar_lea.vmem [#allocation3], %s336
        %p338 = pneg %p61
        %p339 = pneg %p58
        %s340 = sand.u32 %s28, 1
        %s341 = scalar_lea.sflag [#allocation7], %s340
        %s342 = sand.u32 %s74, 1
        %s343 = smul.addr %s342, 128
        %s344 = scalar_lea.vmem [#allocation6], %s343
        %p345 = pneg %p87
        %p346 = pneg %p84
        %s347 = sand.u32 %s28, 1
        %s348 = scalar_lea.sflag [#allocation7], %s347
        %s349 = sand.u32 %s100, 1
        %s350 = smul.addr %s349, 2
        %s351 = scalar_lea.vmem [#allocation8], %s350
        %p352 = pneg %p113
        %p353 = pneg %p110
        %s354 = sand.u32 %s126, 1
        %s355 = scalar_lea.sflag [#allocation10], %s354
        %s356 = sand.u32 %s126, 1
        %s357 = smul.addr %s356, 64
        %s358 = scalar_lea.vmem [#allocation9], %s357
        %p359 = pneg %p139
        %p360 = pneg %p136
        %p361 = pneg %p160
        %p362 = pneg %p157
        %p363 = pneg %p186
        %p364 = pneg %p183
        %s365 = sand.u32 %s173, 1
        %s366 = scalar_lea.sflag [#allocation5], %s365
        %s367 = sand.u32 %s173, 1
        %s368 = smul.addr %s367, 64
        %s369 = scalar_lea.vmem [#allocation11], %s368
        %s370 = smul.u32 8, %s32
        %s371 = smul.u32 2, %s33
        %s372 = smul.u32 2, %s33
        %s373 = smul.u32 16, %s33
        %s374 = smul.u32 8, %s32
        %v376 = vld [vmem:[%s301] sm:$0xf]
        %v377 = vld [vmem:[%s301 + $0x4] sm:$0xf]
        %v378 = vld [vmem:[%s301 + $0x8] sm:$0xf]
        %v379 = vld [vmem:[%s301 + $0xc] sm:$0xf]
        %v380 = vld [vmem:[%s301 + $0x10] sm:$0xf]
        %v381 = vld [vmem:[%s301 + $0x14] sm:$0xf]
        %v382 = vld [vmem:[%s301 + $0x18] sm:$0xf]
        %v383 = vld [vmem:[%s301 + $0x1c] sm:$0xf]
        %v384 = vld [vmem:[%s310] sm:$0xff]
        %v385 = vld [vmem:[%s310 + $0x8] sm:$0xff]
        %v386 = vld [vmem:[%s310 + $0x10] sm:$0xff]
        %v387 = vld [vmem:[%s310 + $0x18] sm:$0xff]
        %v388 = vld [vmem:[%s310 + $0x20] sm:$0xff]
        %v389 = vld [vmem:[%s310 + $0x28] sm:$0xff]
        %v390 = vld [vmem:[%s310 + $0x30] sm:$0xff]
        %v391 = vld [vmem:[%s310 + $0x38] sm:$0xff]
        %v392 = vld [vmem:[%s310 + $0x40] sm:$0xff]
        %v393 = vld [vmem:[%s310 + $0x48] sm:$0xff]
        %v394 = vld [vmem:[%s310 + $0x50] sm:$0xff]
        %v395 = vld [vmem:[%s310 + $0x58] sm:$0xff]
        %v396 = vld [vmem:[%s310 + $0x60] sm:$0xff]
        %v397 = vld [vmem:[%s310 + $0x68] sm:$0xff]
        %v398 = vld [vmem:[%s310 + $0x70] sm:$0xff]
        %v399 = vld [vmem:[%s310 + $0x78] sm:$0xff]
        %v400 = vld [vmem:[%s319] sm:$0x3]
        %v402 = vlaneseq
        %v403 = vshrl.u32 %v402, 7
        %v404 = vsub.s32 0, %v403
        %v405 = vrot.slane %v400, %v404
        %v406 = vlaneseq
        %v407 = vshrl.u32 %v406, 7
        %v408 = vsub.s32 1, %v407
        %v409 = vrot.slane %v400, %v408
        %v420 = vunpack.c.l.b16 %v376
        %v421 = vunpack.c.l.b16 %v377
        %v422 = vunpack.c.l.b16 %v378
        %v423 = vunpack.c.l.b16 %v379
        %v424 = vunpack.c.l.b16 %v380
        %v425 = vunpack.c.l.b16 %v381
        %v426 = vunpack.c.l.b16 %v382
        %v427 = vunpack.c.l.b16 %v383
        %v428 = vpack.c.b16 %v421, %v420
        %v429 = vpack.c.b16 %v423, %v422
        %v430 = vpack.c.b16 %v425, %v424
        %v431 = vpack.c.b16 %v427, %v426
        %v452 = vunpack.c.l.b16 %v384
        %v453 = vunpack.c.h.b16 %v384
        %v454 = vunpack.c.l.b16 %v385
        %v455 = vunpack.c.h.b16 %v385
        %v456 = vunpack.c.l.b16 %v386
        %v457 = vunpack.c.h.b16 %v386
        %v458 = vunpack.c.l.b16 %v387
        %v459 = vunpack.c.h.b16 %v387
        %v460 = vunpack.c.l.b16 %v388
        %v461 = vunpack.c.h.b16 %v388
        %v462 = vunpack.c.l.b16 %v389
        %v463 = vunpack.c.h.b16 %v389
        %v464 = vunpack.c.l.b16 %v390
        %v465 = vunpack.c.h.b16 %v390
        %v466 = vunpack.c.l.b16 %v391
        %v467 = vunpack.c.h.b16 %v391
        %v468 = vunpack.c.l.b16 %v392
        %v469 = vunpack.c.h.b16 %v392
        %v470 = vunpack.c.l.b16 %v393
        %v471 = vunpack.c.h.b16 %v393
        %v472 = vunpack.c.l.b16 %v394
        %v473 = vunpack.c.h.b16 %v394
        %v474 = vunpack.c.l.b16 %v395
        %v475 = vunpack.c.h.b16 %v395
        %v476 = vunpack.c.l.b16 %v396
        %v477 = vunpack.c.h.b16 %v396
        %v478 = vunpack.c.l.b16 %v397
        %v479 = vunpack.c.h.b16 %v397
        %v480 = vunpack.c.l.b16 %v398
        %v481 = vunpack.c.h.b16 %v398
        %v482 = vunpack.c.l.b16 %v399
        %v483 = vunpack.c.h.b16 %v399
        %v484 = vpack.c.b16 %v454, %v452
        %v485 = vpack.c.b16 %v455, %v453
        %v486 = vpack.c.b16 %v458, %v456
        %v487 = vpack.c.b16 %v459, %v457
        %v488 = vpack.c.b16 %v462, %v460
        %v489 = vpack.c.b16 %v463, %v461
        %v490 = vpack.c.b16 %v466, %v464
        %v491 = vpack.c.b16 %v467, %v465
        %v492 = vpack.c.b16 %v470, %v468
        %v493 = vpack.c.b16 %v471, %v469
        %v494 = vpack.c.b16 %v474, %v472
        %v495 = vpack.c.b16 %v475, %v473
        %v496 = vpack.c.b16 %v478, %v476
        %v497 = vpack.c.b16 %v479, %v477
        %v498 = vpack.c.b16 %v482, %v480
        %v499 = vpack.c.b16 %v483, %v481
        %516 = vmatprep.subr.bf16.mxu0 %v499
        %517 = vmatpush1.bf16.msra.mxu0 %v498
        %518 = vmatprep.subr.bf16.mxu0 %v497
        %519 = vmatpush1.bf16.msra.mxu0 %v496
        %520 = vmatprep.subr.bf16.mxu0 %v495
        %521 = vmatpush1.bf16.msra.mxu0 %v494
        %522 = vmatprep.subr.bf16.mxu0 %v493
        %523 = vmatpush1.bf16.msra.mxu0 %v492
        %524 = vmatprep.subr.bf16.mxu0 %v491
        %525 = vmatpush1.bf16.msra.mxu0 %v490
        %526 = vmatprep.subr.bf16.mxu0 %v489
        %527 = vmatpush1.bf16.msra.mxu0 %v488
        %528 = vmatprep.subr.bf16.mxu0 %v487
        %529 = vmatpush1.bf16.msra.mxu0 %v486
        %530 = vmatprep.subr.bf16.mxu0 %v485
        %531 = vmatpush1.bf16.msra.mxu0 %v484
        %532 = vmatprep.subr.bf16.mxu0 0
        %533 = vmatpush2.bf16.msra.mxu0 0
        %534 = vmatprep.subr.bf16.mxu0 0
        %535 = vmatpush2.bf16.msra.mxu0 0
        %536 = vmatprep.subr.bf16.mxu0 0
        %537 = vmatpush2.bf16.msra.mxu0 0
        %538 = vmatprep.subr.bf16.mxu0 0
        %539 = vmatpush2.bf16.msra.mxu0 0
        %540 = vmatprep.subr.bf16.mxu0 0
        %541 = vmatpush2.bf16.msra.mxu0 0
        %542 = vmatprep.subr.bf16.mxu0 0
        %543 = vmatpush2.bf16.msra.mxu0 0
        %544 = vmatprep.subr.bf16.mxu0 0
        %545 = vmatpush2.bf16.msra.mxu0 0
        %546 = vmatprep.subr.bf16.mxu0 0
        %547 = vmatpush2.bf16.msra.mxu0 0
        %548 = vmatprep.mubr.bf16.mxu0 0
        %549 = vmatmul.mubr.bf16.gmra.mxu0 %v428
        %v550 = vpop.f32.mrf.mxu0
        %v551 = vadd.f32 %v405, %v550
        %v552 = vpop.f32.mrf.mxu0
        %v553 = vadd.f32 %v409, %v552
        %v554 = vpop.f32.mrf.mxu0
        %v555 = vadd.f32 %v405, %v554
        %v556 = vpop.f32.mrf.mxu0
        %v557 = vadd.f32 %v409, %v556
        %558 = vmatprep.mubr.bf16.mxu0 0
        %559 = vmatmul.mubr.bf16.gmra.mxu0 %v429
        %v560 = vpop.f32.mrf.mxu0
        %v561 = vadd.f32 %v405, %v560
        %v562 = vpop.f32.mrf.mxu0
        %v563 = vadd.f32 %v409, %v562
        %v564 = vpop.f32.mrf.mxu0
        %v565 = vadd.f32 %v405, %v564
        %v566 = vpop.f32.mrf.mxu0
        %v567 = vadd.f32 %v409, %v566
        %568 = vmatprep.mubr.bf16.mxu0 0
        %569 = vmatmul.mubr.bf16.gmra.mxu0 %v430
        %v570 = vpop.f32.mrf.mxu0
        %v571 = vadd.f32 %v405, %v570
        %v572 = vpop.f32.mrf.mxu0
        %v573 = vadd.f32 %v409, %v572
        %v574 = vpop.f32.mrf.mxu0
        %v575 = vadd.f32 %v405, %v574
        %v576 = vpop.f32.mrf.mxu0
        %v577 = vadd.f32 %v409, %v576
        %578 = vmatprep.mubr.bf16.mxu0 0
        %579 = vmatmul.mubr.bf16.gmra.mxu0 %v431
        %v580 = vpop.f32.mrf.mxu0
        %v581 = vadd.f32 %v405, %v580
        %v582 = vpop.f32.mrf.mxu0
        %v583 = vadd.f32 %v409, %v582
        %v584 = vpop.f32.mrf.mxu0
        %v585 = vadd.f32 %v405, %v584
        %v586 = vpop.f32.mrf.mxu0
        %v587 = vadd.f32 %v409, %v586
        %588 = vdwg.mxu0
        %v589 = vmul.f32 %v551, 0.5
        %v590 = vmul.f32 %v555, 0.5
        %v591 = vmul.f32 %v561, 0.5
        %v592 = vmul.f32 %v565, 0.5
        %v593 = vmul.f32 %v571, 0.5
        %v594 = vmul.f32 %v575, 0.5
        %v595 = vmul.f32 %v581, 0.5
        %v596 = vmul.f32 %v585, 0.5
        %v597 = vmul.f32 %v551, 0.70710677
        %v598 = vmul.f32 %v555, 0.70710677
        %v599 = vmul.f32 %v561, 0.70710677
        %v600 = vmul.f32 %v565, 0.70710677
        %v601 = vmul.f32 %v571, 0.70710677
        %v602 = vmul.f32 %v575, 0.70710677
        %v603 = vmul.f32 %v581, 0.70710677
        %v604 = vmul.f32 %v585, 0.70710677
        %v605 = verf.f32.pop %v597
        %v606 = verf.f32.pop %v598
        %v607 = verf.f32.pop %v599
        %v608 = verf.f32.pop %v600
        %v609 = verf.f32.pop %v601
        %v610 = verf.f32.pop %v602
        %v611 = verf.f32.pop %v603
        %v612 = verf.f32.pop %v604
        %v613 = vadd.f32 %v605, 1.0
        %v614 = vadd.f32 %v606, 1.0
        %v615 = vadd.f32 %v607, 1.0
        %v616 = vadd.f32 %v608, 1.0
        %v617 = vadd.f32 %v609, 1.0
        %v618 = vadd.f32 %v610, 1.0
        %v619 = vadd.f32 %v611, 1.0
        %v620 = vadd.f32 %v612, 1.0
        %v621 = vmul.f32 %v589, %v613
        %v622 = vmul.f32 %v590, %v614
        %v623 = vmul.f32 %v591, %v615
        %v624 = vmul.f32 %v592, %v616
        %v625 = vmul.f32 %v593, %v617
        %v626 = vmul.f32 %v594, %v618
        %v627 = vmul.f32 %v595, %v619
        %v628 = vmul.f32 %v596, %v620
        %v629 = vmul.f32 %v621, %v553
        %v630 = vmul.f32 %v622, %v557
        %v631 = vmul.f32 %v623, %v563
        %v632 = vmul.f32 %v624, %v567
        %v633 = vmul.f32 %v625, %v573
        %v634 = vmul.f32 %v626, %v577
        %v635 = vmul.f32 %v627, %v583
        %v636 = vmul.f32 %v628, %v587
        %v637 = vpack.c.bf16 %v630, %v629
        %v638 = vpack.c.bf16 %v632, %v631
        %v639 = vpack.c.bf16 %v634, %v633
        %v640 = vpack.c.bf16 %v636, %v635
        %v641 = vld [vmem:[%s328] sm:$0xf]
        %v642 = vld [vmem:[%s328 + $0x4] sm:$0xf]
        %v643 = vld [vmem:[%s328 + $0x8] sm:$0xf]
        %v644 = vld [vmem:[%s328 + $0xc] sm:$0xf]
        %v645 = vld [vmem:[%s328 + $0x10] sm:$0xf]
        %v646 = vld [vmem:[%s328 + $0x14] sm:$0xf]
        %v647 = vld [vmem:[%s328 + $0x18] sm:$0xf]
        %v648 = vld [vmem:[%s328 + $0x1c] sm:$0xf]
        %v649 = vld [vmem:[%s328 + $0x20] sm:$0xf]
        %v650 = vld [vmem:[%s328 + $0x24] sm:$0xf]
        %v651 = vld [vmem:[%s328 + $0x28] sm:$0xf]
        %v652 = vld [vmem:[%s328 + $0x2c] sm:$0xf]
        %v653 = vld [vmem:[%s328 + $0x30] sm:$0xf]
        %v654 = vld [vmem:[%s328 + $0x34] sm:$0xf]
        %v655 = vld [vmem:[%s328 + $0x38] sm:$0xf]
        %v656 = vld [vmem:[%s328 + $0x3c] sm:$0xf]
        %v673 = vunpack.c.l.b16 %v641
        %v674 = vunpack.c.l.b16 %v642
        %v675 = vunpack.c.l.b16 %v643
        %v676 = vunpack.c.l.b16 %v644
        %v677 = vunpack.c.l.b16 %v645
        %v678 = vunpack.c.l.b16 %v646
        %v679 = vunpack.c.l.b16 %v647
        %v680 = vunpack.c.l.b16 %v648
        %v681 = vunpack.c.l.b16 %v649
        %v682 = vunpack.c.l.b16 %v650
        %v683 = vunpack.c.l.b16 %v651
        %v684 = vunpack.c.l.b16 %v652
        %v685 = vunpack.c.l.b16 %v653
        %v686 = vunpack.c.l.b16 %v654
        %v687 = vunpack.c.l.b16 %v655
        %v688 = vunpack.c.l.b16 %v656
        %v689 = vpack.c.b16 %v674, %v673
        %v690 = vpack.c.b16 %v676, %v675
        %v691 = vpack.c.b16 %v678, %v677
        %v692 = vpack.c.b16 %v680, %v679
        %v693 = vpack.c.b16 %v682, %v681
        %v694 = vpack.c.b16 %v684, %v683
        %v695 = vpack.c.b16 %v686, %v685
        %v696 = vpack.c.b16 %v688, %v687
        %705 = vmatprep.subr.bf16.mxu0 0
        %706 = vmatpush1.bf16.msra.mxu0 %v696
        %707 = vmatprep.subr.bf16.mxu0 0
        %708 = vmatpush1.bf16.msra.mxu0 %v695
        %709 = vmatprep.subr.bf16.mxu0 0
        %710 = vmatpush1.bf16.msra.mxu0 %v694
        %711 = vmatprep.subr.bf16.mxu0 0
        %712 = vmatpush1.bf16.msra.mxu0 %v693
        %713 = vmatprep.subr.bf16.mxu0 0
        %714 = vmatpush1.bf16.msra.mxu0 %v692
        %715 = vmatprep.subr.bf16.mxu0 0
        %716 = vmatpush1.bf16.msra.mxu0 %v691
        %717 = vmatprep.subr.bf16.mxu0 0
        %718 = vmatpush1.bf16.msra.mxu0 %v690
        %719 = vmatprep.subr.bf16.mxu0 0
        %720 = vmatpush1.bf16.msra.mxu0 %v689
        %721 = vmatprep.subr.bf16.mxu0 0
        %722 = vmatpush2.bf16.msra.mxu0 0
        %723 = vmatprep.subr.bf16.mxu0 0
        %724 = vmatpush2.bf16.msra.mxu0 0
        %725 = vmatprep.subr.bf16.mxu0 0
        %726 = vmatpush2.bf16.msra.mxu0 0
        %727 = vmatprep.subr.bf16.mxu0 0
        %728 = vmatpush2.bf16.msra.mxu0 0
        %729 = vmatprep.subr.bf16.mxu0 0
        %730 = vmatpush2.bf16.msra.mxu0 0
        %731 = vmatprep.subr.bf16.mxu0 0
        %732 = vmatpush2.bf16.msra.mxu0 0
        %733 = vmatprep.subr.bf16.mxu0 0
        %734 = vmatpush2.bf16.msra.mxu0 0
        %735 = vmatprep.subr.bf16.mxu0 0
        %736 = vmatpush2.bf16.msra.mxu0 0
        %737 = vmatprep.mubr.bf16.mxu0 0
        %738 = vmatmul.mubr.bf16.gmra.mxu0 %v637
        %v739 = vpop.f32.mrf.mxu0
        %v740 = vadd.f32 0.0, %v739
        %v741 = vpop.f32.mrf.mxu0
        %v742 = vpop.f32.mrf.mxu0
        %v743 = vadd.f32 0.0, %v742
        %v744 = vpop.f32.mrf.mxu0
        %745 = vmatprep.mubr.bf16.mxu0 0
        %746 = vmatmul.mubr.bf16.gmra.mxu0 %v638
        %v747 = vpop.f32.mrf.mxu0
        %v748 = vadd.f32 0.0, %v747
        %v749 = vpop.f32.mrf.mxu0
        %v750 = vpop.f32.mrf.mxu0
        %v751 = vadd.f32 0.0, %v750
        %v752 = vpop.f32.mrf.mxu0
        %753 = vmatprep.mubr.bf16.mxu0 0
        %754 = vmatmul.mubr.bf16.gmra.mxu0 %v639
        %v755 = vpop.f32.mrf.mxu0
        %v756 = vadd.f32 0.0, %v755
        %v757 = vpop.f32.mrf.mxu0
        %v758 = vpop.f32.mrf.mxu0
        %v759 = vadd.f32 0.0, %v758
        %v760 = vpop.f32.mrf.mxu0
        %761 = vmatprep.mubr.bf16.mxu0 0
        %762 = vmatmul.mubr.bf16.gmra.mxu0 %v640
        %v763 = vpop.f32.mrf.mxu0
        %v764 = vadd.f32 0.0, %v763
        %v765 = vpop.f32.mrf.mxu0
        %v766 = vpop.f32.mrf.mxu0
        %v767 = vadd.f32 0.0, %v766
        %v768 = vpop.f32.mrf.mxu0
        %769 = vdwg.mxu0
        %p770 = scmp.eq.s32.totalorder %s33, 0
        // Predicated region
        $region57: #{tpu_custom_call.1} parent=39 // pred_check
          %p771 = pneg %p770
        $region58: #{tpu_custom_call.1} parent=39 // pred_check_branch
          %773 = sbr.rel (%p771) target = $region60
        $region59: #{tpu_custom_call.1} parent=39 // pred_region
          %v774 = vld [vmem:[%s4] sm:$0x1]
          %v776 = vlaneseq
          %v777 = vshrl.u32 %v776, 7
          %v778 = vsub.s32 0, %v777
          %v779 = vrot.slane %v774, %v778
          %781 = vst [vmem:[#allocation2] sm:$0xff] %v779
          %782 = vst [vmem:[#allocation2 + $0x8] sm:$0xff] %v779
          %783 = vst [vmem:[#allocation2 + $0x10] sm:$0xff] %v779
          %784 = vst [vmem:[#allocation2 + $0x18] sm:$0xff] %v779
          %785 = vst [vmem:[#allocation2 + $0x20] sm:$0xff] %v779
          %786 = vst [vmem:[#allocation2 + $0x28] sm:$0xff] %v779
          %787 = vst [vmem:[#allocation2 + $0x30] sm:$0xff] %v779
          %788 = vst [vmem:[#allocation2 + $0x38] sm:$0xff] %v779
        $region60: #{tpu_custom_call.1} parent=39 // pred_fallthru
          _
        %v789 = vld [vmem:[#allocation2] sm:$0xff]
        %v790 = vld [vmem:[#allocation2 + $0x8] sm:$0xff]
        %v791 = vld [vmem:[#allocation2 + $0x10] sm:$0xff]
        %v792 = vld [vmem:[#allocation2 + $0x18] sm:$0xff]
        %v793 = vld [vmem:[#allocation2 + $0x20] sm:$0xff]
        %v794 = vld [vmem:[#allocation2 + $0x28] sm:$0xff]
        %v795 = vld [vmem:[#allocation2 + $0x30] sm:$0xff]
        %v796 = vld [vmem:[#allocation2 + $0x38] sm:$0xff]
        %v797 = vadd.f32 %v789, %v740
        %v798 = vadd.f32 %v790, %v743
        %v799 = vadd.f32 %v791, %v748
        %v800 = vadd.f32 %v792, %v751
        %v801 = vadd.f32 %v793, %v756
        %v802 = vadd.f32 %v794, %v759
        %v803 = vadd.f32 %v795, %v764
        %v804 = vadd.f32 %v796, %v767
        %805 = vst [vmem:[#allocation2] sm:$0xff] %v797
        %806 = vst [vmem:[#allocation2 + $0x8] sm:$0xff] %v798
        %807 = vst [vmem:[#allocation2 + $0x10] sm:$0xff] %v799
        %808 = vst [vmem:[#allocation2 + $0x18] sm:$0xff] %v800
        %809 = vst [vmem:[#allocation2 + $0x20] sm:$0xff] %v801
        %810 = vst [vmem:[#allocation2 + $0x28] sm:$0xff] %v802
        %811 = vst [vmem:[#allocation2 + $0x30] sm:$0xff] %v803
        %812 = vst [vmem:[#allocation2 + $0x38] sm:$0xff] %v804
        %p813 = scmp.eq.s32.totalorder %s33, 3
        // Predicated region
        $region61: #{tpu_custom_call.1} parent=39 // pred_check
          %p814 = pneg %p813
        $region62: #{tpu_custom_call.1} parent=39 // pred_check_branch
          %816 = sbr.rel (%p814) target = $region64
        $region63: #{tpu_custom_call.1} parent=39 // pred_region
          %v817 = vld [vmem:[#allocation2] sm:$0xff]
          %v818 = vld [vmem:[#allocation2 + $0x8] sm:$0xff]
          %v819 = vld [vmem:[#allocation2 + $0x10] sm:$0xff]
          %v820 = vld [vmem:[#allocation2 + $0x18] sm:$0xff]
          %v821 = vld [vmem:[#allocation2 + $0x20] sm:$0xff]
          %v822 = vld [vmem:[#allocation2 + $0x28] sm:$0xff]
          %v823 = vld [vmem:[#allocation2 + $0x30] sm:$0xff]
          %v824 = vld [vmem:[#allocation2 + $0x38] sm:$0xff]
          %825 = vst [vmem:[%s369] sm:$0xff] %v817
          %826 = vst [vmem:[%s369 + $0x8] sm:$0xff] %v818
          %827 = vst [vmem:[%s369 + $0x10] sm:$0xff] %v819
          %828 = vst [vmem:[%s369 + $0x18] sm:$0xff] %v820
          %829 = vst [vmem:[%s369 + $0x20] sm:$0xff] %v821
          %830 = vst [vmem:[%s369 + $0x28] sm:$0xff] %v822
          %831 = vst [vmem:[%s369 + $0x30] sm:$0xff] %v823
          %832 = vst [vmem:[%s369 + $0x38] sm:$0xff] %v824
        $region64: #{tpu_custom_call.1} parent=39 // pred_fallthru
          _
        %s833 = sand.u32 %s173, 1
        %s834 = scalar_lea.sflag [#allocation5], %s833
        %s835 = sand.u32 %s173, 1
        %s836 = smul.addr %s835, 64
        %s837 = scalar_lea.vmem [#allocation11], %s836
        // Predicated region
        $region65: #{tpu_custom_call.1} parent=39 // pred_check
          %p838 = pneg %p183
        $region66: #{tpu_custom_call.1} parent=39 // pred_check_branch
          %840 = sbr.rel (%p838) target = $region68
        $region67: #{tpu_custom_call.1} parent=39 // pred_region
          %s841 = smul.u32 8, %s32
          %s843 = ssub.s32 1024, 1024
          %844 = vsyncadd %s834, %s843
          %s845 = smul.addr %s841, 128
          %s846 = scalar_lea.hbm %s5, %s845
          %s847 = sshll.u32 %s837, 4
          %s848 = int_to_ptr.vmem [resolvable:$true] %s847
          %853 = dma.vmem_to_hbm [thread:$0]  %s848, 1024, %s846, %s834, 128, 128, 8
        $region68: #{tpu_custom_call.1} parent=39 // pred_fallthru
          _
      $region40: #{tpu_custom_call.1} parent=5 // pred_fallthru
        _
      %p854 = scmp.le.s32.totalorder 2, %s23
      // Predicated region
      $region69: #{tpu_custom_call.1} parent=5 // pred_check
        %p855 = pneg %p854
      $region70: #{tpu_custom_call.1} parent=5 // pred_check_branch
        %857 = sbr.rel (%p855) target = $region72
      $region71: #{tpu_custom_call.1} parent=5 // pred_region
        %s858 = ssub.s32 %s23, 2
        // Predicated region
        $region73: #{tpu_custom_call.1} parent=71 // pred_check
          %p859 = pneg %p189
        $region74: #{tpu_custom_call.1} parent=71 // pred_check_branch
          %861 = sbr.rel (%p859) target = $region76
        $region75: #{tpu_custom_call.1} parent=71 // pred_region
          %s862 = sand.u32 %s174, 1
          %s863 = scalar_lea.sflag [#allocation5], %s862
          %s864 = sand.u32 %s174, 1
          %s865 = smul.addr %s864, 64
          %s866 = scalar_lea.vmem [#allocation11], %s865
          %867 = dma.done %s863, 1024
        $region76: #{tpu_custom_call.1} parent=71 // pred_fallthru
          _
      $region72: #{tpu_custom_call.1} parent=5 // pred_fallthru
        _
    $region6: #{tpu_custom_call.1} parent=1 // loop_footer
      %s27 = sadd.s32 1, %s23
    $region7: #{tpu_custom_call.1} parent=1 // loop_footer_branch
      %22 = sbr.rel target = $region3
    $region8: #{tpu_custom_call.1} parent=1 // loop_exit
      _
    %868 = vsyncpa [#allocation4], 1
    %s869 = scalar_lea.sflag [#allocation4], 1
    %870 = vsyncpa %s869, 1
    %871 = vsyncpa [#allocation7], 1
    %s872 = scalar_lea.sflag [#allocation7], 1
    %873 = vsyncpa %s872, 1
    %874 = vsyncpa [#allocation10], 1
    %s875 = scalar_lea.sflag [#allocation10], 1
    %876 = vsyncpa %s875, 1
    %877 = vsyncpa [#allocation5], 1
    %s878 = scalar_lea.sflag [#allocation5], 1
    %879 = vsyncpa %s878, 1

</llo_original>
